<compile_context>
chip_gen: v7x
topology: tpu7x:2x2x1
jax: 0.10.0
libtpu: 0.0.40
codegen_flags: <defaults>
</compile_context>

<pallas_src>
import jax
import jax.numpy as jnp
from jax.experimental import pallas as pl
from jax.experimental.pallas import tpu as pltpu


def _recursive_kernel(x_ref, w_ref, bias_ref, h_ref):
    """x_ref: (4, tm, in)  w_ref: (in, out)  bias_ref: (1, out)  h_ref: (4, tm, out)."""
    w = w_ref[...]          # VMEM-resident across grid steps (constant index_map)
    bias = bias_ref[...]    # (1, out), broadcasts over rows

    def affine(k):
        # W is tiny (~16 KiB); issuing 4 separate MXU passes avoids any VMEM
        # copy of the inputs and keeps the live set to one (tm, out) z at a time.
        return jnp.dot(x_ref[k], w, preferred_element_type=jnp.float32) + bias

    def sigmoid(v):
        # tanh form: one EUP op, no f32 divide on the VALU.
        return 0.5 * jnp.tanh(0.5 * v) + 0.5

    # Cascaded gating; store each result as soon as it exists (interleaved vst).
    h1 = affine(0)
    h_ref[0] = h1.astype(h_ref.dtype)
    h2 = h1 * sigmoid(affine(1))
    h_ref[1] = h2.astype(h_ref.dtype)
    h3 = h2 * sigmoid(affine(2))
    h_ref[2] = h3.astype(h_ref.dtype)
    h4 = h3 * sigmoid(affine(3))
    h_ref[3] = h4.astype(h_ref.dtype)


def _pick_batch_tile(batch, max_tile):
    """Multiple-of-8 row tile; guarantees >= 2 grid steps when batch > 8 so the
    parallel batch axis can be split across TensorCores (v7x)."""
    if batch <= 8:
        return batch                      # single full-extent block (exempt from (8,128))
    tm = max(8, (min(max_tile, batch) // 8) * 8)
    if pl.cdiv(batch, tm) < 2:
        half = ((batch + 1) // 2 + 7) // 8 * 8
        tm = max(8, min(tm, half))        # at least two grid steps
    return tm


def recursive_layer(x1, x2, x3, x4, weight_t, bias_total, *, block_batch=2048):
    """weight_t: (input_dim, output_dim); bias_total: (output_dim,) = linear.bias + b."""
    batch, in_dim = x1.shape
    out_dim = weight_t.shape[1]

    x_all = jnp.stack([x1, x2, x3, x4], axis=0)            # (4, batch, in)
    bias2d = bias_total.reshape(1, out_dim).astype(jnp.float32)

    tm = _pick_batch_tile(batch, block_batch)
    grid = (pl.cdiv(batch, tm),)                            # last block padded/masked

    x_spec = pl.BlockSpec((4, tm, in_dim), lambda i: (0, i, 0))
    w_spec = pl.BlockSpec((in_dim, out_dim), lambda i: (0, 0))   # VMEM-resident
    b_spec = pl.BlockSpec((1, out_dim), lambda i: (0, 0))        # VMEM-resident
    h_spec = pl.BlockSpec((4, tm, out_dim), lambda i: (0, i, 0))

    # Adaptive scoped-VMEM limit: double-buffered I/O tiles + resident weight,
    # with 2x headroom, clamped to a range that is safe on all generations
    # (>= default 32 MiB, <= 48 MiB so it never brushes v7x's 64 MiB physical).
    elt = 4
    tile_bytes = 4 * tm * (in_dim + out_dim) * elt
    resident_bytes = (in_dim * out_dim + out_dim) * elt
    needed = 2 * tile_bytes + 2 * resident_bytes
    vmem_limit = int(min(48 << 20, max(32 << 20, 2 * needed)))

    h_all = pl.pallas_call(
        _recursive_kernel,
        out_shape=jax.ShapeDtypeStruct((4, batch, out_dim), jnp.float32),
        grid=grid,
        in_specs=[x_spec, w_spec, b_spec],
        out_specs=h_spec,
        compiler_params=pltpu.CompilerParams(
            dimension_semantics=("parallel",),   # megacore split on v7x; neutral elsewhere
            vmem_limit_bytes=vmem_limit),
    )(x_all, weight_t, bias2d)

    return h_all[0], h_all[1], h_all[2], h_all[3]


def _reference(x1, x2, x3, x4, weight_t, bias_total):
    def aff(x):
        return x @ weight_t + bias_total
    h1 = aff(x1)
    h2 = h1 * jax.nn.sigmoid(aff(x2))
    h3 = h2 * jax.nn.sigmoid(aff(x3))
    h4 = h3 * jax.nn.sigmoid(aff(x4))
    return h1, h2, h3, h4


if __name__ == "__main__":
    # Small shapes consistent with the module: batch=16, input_dim=32, output_dim=128.
    # block_batch=8 forces the batch grid to actually iterate (grid=(2,)).
    batch, input_dim, output_dim = 16, 32, 128

    key = jax.random.PRNGKey(0)
    kx1, kx2, kx3, kx4, kw, kb = jax.random.split(key, 6)

    x1 = jax.random.normal(kx1, (batch, input_dim), dtype=jnp.float32)
    x2 = jax.random.normal(kx2, (batch, input_dim), dtype=jnp.float32)
    x3 = jax.random.normal(kx3, (batch, input_dim), dtype=jnp.float32)
    x4 = jax.random.normal(kx4, (batch, input_dim), dtype=jnp.float32)

    # Deterministic init mimicking nn.Linear (uniform +-1/sqrt(fan_in));
    # extra parameter b is zeros (as in __init__).
    bound = 1.0 / jnp.sqrt(jnp.float32(input_dim))
    weight = jax.random.uniform(kw, (output_dim, input_dim),
                                minval=-bound, maxval=bound, dtype=jnp.float32)
    lin_bias = jax.random.uniform(kb, (output_dim,),
                                  minval=-bound, maxval=bound, dtype=jnp.float32)
    b_param = jnp.zeros((output_dim,), dtype=jnp.float32)

    weight_t = weight.T                       # (input_dim, output_dim)
    bias_total = lin_bias + b_param           # Linear bias + self.b

    outs = recursive_layer(x1, x2, x3, x4, weight_t, bias_total, block_batch=8)
    outs = jax.block_until_ready(outs)

    refs = _reference(x1, x2, x3, x4, weight_t, bias_total)
    for o, r in zip(outs, refs):
        assert o.shape == (batch, output_dim)
        assert jnp.allclose(o, r, atol=1e-5, rtol=1e-5)

    print("KERNEL_OK")
</pallas_src>

<mosaic_0001>
module attributes {stable_mosaic.version = 11 : i64} {
  func.func @_recursive_kernel(%arg0: i32, %arg1: memref<4x8x32xf32, #tpu.memory_space<vmem>>, %arg2: memref<32x128xf32, #tpu.memory_space<vmem>>, %arg3: memref<1x128xf32, #tpu.memory_space<vmem>>, %arg4: memref<4x8x128xf32, #tpu.memory_space<vmem>>) attributes {dimension_semantics = [#tpu.dimension_semantics<parallel>], iteration_bounds = array<i64: 2>, scalar_prefetch = 0 : i64, scratch_operands = 0 : i64, tpu.core_type = #tpu.core_type<tc>, window_params = [{transform_indices = @transform_0, window_bounds = array<i64: 4, 8, 32>}, {pipeline_mode = #tpu.pipeline_mode<synchronous>, transform_indices = @transform_1, window_bounds = array<i64: 32, 128>}, {pipeline_mode = #tpu.pipeline_mode<synchronous>, transform_indices = @transform_2, window_bounds = array<i64: 1, 128>}, {transform_indices = @transform_3, window_bounds = array<i64: 4, 8, 128>}]} {
    %c0 = arith.constant 0 : index
    %c0_0 = arith.constant 0 : index
    %0 = vector.load %arg2[%c0, %c0_0] : memref<32x128xf32, #tpu.memory_space<vmem>>, vector<32x128xf32>
    %c0_1 = arith.constant 0 : index
    %c0_2 = arith.constant 0 : index
    %1 = vector.load %arg3[%c0_1, %c0_2] : memref<1x128xf32, #tpu.memory_space<vmem>>, vector<1x128xf32>
    %c0_3 = arith.constant 0 : index
    %c0_4 = arith.constant 0 : index
    %c0_5 = arith.constant 0 : index
    %2 = vector.load %arg1[%c0_3, %c0_4, %c0_5] : memref<4x8x32xf32, #tpu.memory_space<vmem>>, vector<1x8x32xf32>
    %3 = vector.shape_cast %2 : vector<1x8x32xf32> to vector<8x32xf32>
    %cst = arith.constant dense<0.000000e+00> : vector<8x128xf32>
    %4 = tpu.matmul %3, %0, %cst {dimension_numbers = #tpu.dot_dimension_numbers<[1], [0], [0], [1], [0, 0, 1, 1], [], []>} : vector<8x32xf32>, vector<32x128xf32>, vector<8x128xf32> -> vector<8x128xf32>
    %5 = vector.broadcast %1 : vector<1x128xf32> to vector<8x128xf32>
    %6 = arith.addf %4, %5 : vector<8x128xf32>
    %c0_6 = arith.constant 0 : index
    %c0_7 = arith.constant 0 : index
    %c0_8 = arith.constant 0 : index
    %7 = vector.load %arg4[%c0_6, %c0_7, %c0_8] : memref<4x8x128xf32, #tpu.memory_space<vmem>>, vector<1x8x128xf32>
    %8 = vector.shape_cast %7 : vector<1x8x128xf32> to vector<8x128xf32>
    %9 = vector.shape_cast %6 : vector<8x128xf32> to vector<1x8x128xf32>
    tpu.vector_store %arg4[%c0_6, %c0_7, %c0_8], %9 {strides = array<i32>} : memref<4x8x128xf32, #tpu.memory_space<vmem>>, vector<1x8x128xf32>,
    %c1 = arith.constant 1 : index
    %c0_9 = arith.constant 0 : index
    %c0_10 = arith.constant 0 : index
    %10 = vector.load %arg1[%c1, %c0_9, %c0_10] : memref<4x8x32xf32, #tpu.memory_space<vmem>>, vector<1x8x32xf32>
    %11 = vector.shape_cast %10 : vector<1x8x32xf32> to vector<8x32xf32>
    %cst_11 = arith.constant dense<0.000000e+00> : vector<8x128xf32>
    %12 = tpu.matmul %11, %0, %cst_11 {dimension_numbers = #tpu.dot_dimension_numbers<[1], [0], [0], [1], [0, 0, 1, 1], [], []>} : vector<8x32xf32>, vector<32x128xf32>, vector<8x128xf32> -> vector<8x128xf32>
    %13 = vector.broadcast %1 : vector<1x128xf32> to vector<8x128xf32>
    %14 = arith.addf %12, %13 : vector<8x128xf32>
    %cst_12 = arith.constant 5.000000e-01 : f32
    %15 = vector.broadcast %cst_12 : f32 to vector<8x128xf32>
    %16 = arith.mulf %15, %14 : vector<8x128xf32>
    %17 = math.tanh %16 : vector<8x128xf32>
    %cst_13 = arith.constant 5.000000e-01 : f32
    %18 = vector.broadcast %cst_13 : f32 to vector<8x128xf32>
    %19 = arith.mulf %18, %17 : vector<8x128xf32>
    %cst_14 = arith.constant 5.000000e-01 : f32
    %20 = vector.broadcast %cst_14 : f32 to vector<8x128xf32>
    %21 = arith.addf %19, %20 : vector<8x128xf32>
    %22 = arith.mulf %6, %21 : vector<8x128xf32>
    %c1_15 = arith.constant 1 : index
    %c0_16 = arith.constant 0 : index
    %c0_17 = arith.constant 0 : index
    %23 = vector.load %arg4[%c1_15, %c0_16, %c0_17] : memref<4x8x128xf32, #tpu.memory_space<vmem>>, vector<1x8x128xf32>
    %24 = vector.shape_cast %23 : vector<1x8x128xf32> to vector<8x128xf32>
    %25 = vector.shape_cast %22 : vector<8x128xf32> to vector<1x8x128xf32>
    tpu.vector_store %arg4[%c1_15, %c0_16, %c0_17], %25 {strides = array<i32>} : memref<4x8x128xf32, #tpu.memory_space<vmem>>, vector<1x8x128xf32>,
    %c2 = arith.constant 2 : index
    %c0_18 = arith.constant 0 : index
    %c0_19 = arith.constant 0 : index
    %26 = vector.load %arg1[%c2, %c0_18, %c0_19] : memref<4x8x32xf32, #tpu.memory_space<vmem>>, vector<1x8x32xf32>
    %27 = vector.shape_cast %26 : vector<1x8x32xf32> to vector<8x32xf32>
    %cst_20 = arith.constant dense<0.000000e+00> : vector<8x128xf32>
    %28 = tpu.matmul %27, %0, %cst_20 {dimension_numbers = #tpu.dot_dimension_numbers<[1], [0], [0], [1], [0, 0, 1, 1], [], []>} : vector<8x32xf32>, vector<32x128xf32>, vector<8x128xf32> -> vector<8x128xf32>
    %29 = vector.broadcast %1 : vector<1x128xf32> to vector<8x128xf32>
    %30 = arith.addf %28, %29 : vector<8x128xf32>
    %cst_21 = arith.constant 5.000000e-01 : f32
    %31 = vector.broadcast %cst_21 : f32 to vector<8x128xf32>
    %32 = arith.mulf %31, %30 : vector<8x128xf32>
    %33 = math.tanh %32 : vector<8x128xf32>
    %cst_22 = arith.constant 5.000000e-01 : f32
    %34 = vector.broadcast %cst_22 : f32 to vector<8x128xf32>
    %35 = arith.mulf %34, %33 : vector<8x128xf32>
    %cst_23 = arith.constant 5.000000e-01 : f32
    %36 = vector.broadcast %cst_23 : f32 to vector<8x128xf32>
    %37 = arith.addf %35, %36 : vector<8x128xf32>
    %38 = arith.mulf %22, %37 : vector<8x128xf32>
    %c2_24 = arith.constant 2 : index
    %c0_25 = arith.constant 0 : index
    %c0_26 = arith.constant 0 : index
    %39 = vector.load %arg4[%c2_24, %c0_25, %c0_26] : memref<4x8x128xf32, #tpu.memory_space<vmem>>, vector<1x8x128xf32>
    %40 = vector.shape_cast %39 : vector<1x8x128xf32> to vector<8x128xf32>
    %41 = vector.shape_cast %38 : vector<8x128xf32> to vector<1x8x128xf32>
    tpu.vector_store %arg4[%c2_24, %c0_25, %c0_26], %41 {strides = array<i32>} : memref<4x8x128xf32, #tpu.memory_space<vmem>>, vector<1x8x128xf32>,
    %c3 = arith.constant 3 : index
    %c0_27 = arith.constant 0 : index
    %c0_28 = arith.constant 0 : index
    %42 = vector.load %arg1[%c3, %c0_27, %c0_28] : memref<4x8x32xf32, #tpu.memory_space<vmem>>, vector<1x8x32xf32>
    %43 = vector.shape_cast %42 : vector<1x8x32xf32> to vector<8x32xf32>
    %cst_29 = arith.constant dense<0.000000e+00> : vector<8x128xf32>
    %44 = tpu.matmul %43, %0, %cst_29 {dimension_numbers = #tpu.dot_dimension_numbers<[1], [0], [0], [1], [0, 0, 1, 1], [], []>} : vector<8x32xf32>, vector<32x128xf32>, vector<8x128xf32> -> vector<8x128xf32>
    %45 = vector.broadcast %1 : vector<1x128xf32> to vector<8x128xf32>
    %46 = arith.addf %44, %45 : vector<8x128xf32>
    %cst_30 = arith.constant 5.000000e-01 : f32
    %47 = vector.broadcast %cst_30 : f32 to vector<8x128xf32>
    %48 = arith.mulf %47, %46 : vector<8x128xf32>
    %49 = math.tanh %48 : vector<8x128xf32>
    %cst_31 = arith.constant 5.000000e-01 : f32
    %50 = vector.broadcast %cst_31 : f32 to vector<8x128xf32>
    %51 = arith.mulf %50, %49 : vector<8x128xf32>
    %cst_32 = arith.constant 5.000000e-01 : f32
    %52 = vector.broadcast %cst_32 : f32 to vector<8x128xf32>
    %53 = arith.addf %51, %52 : vector<8x128xf32>
    %54 = arith.mulf %38, %53 : vector<8x128xf32>
    %c3_33 = arith.constant 3 : index
    %c0_34 = arith.constant 0 : index
    %c0_35 = arith.constant 0 : index
    %55 = vector.load %arg4[%c3_33, %c0_34, %c0_35] : memref<4x8x128xf32, #tpu.memory_space<vmem>>, vector<1x8x128xf32>
    %56 = vector.shape_cast %55 : vector<1x8x128xf32> to vector<8x128xf32>
    %57 = vector.shape_cast %54 : vector<8x128xf32> to vector<1x8x128xf32>
    tpu.vector_store %arg4[%c3_33, %c0_34, %c0_35], %57 {strides = array<i32>} : memref<4x8x128xf32, #tpu.memory_space<vmem>>, vector<1x8x128xf32>,
    return
  }
  func.func @transform_0(%arg0: i32) -> (i32, i32, i32) {
    %c0_i32 = arith.constant 0 : i32
    %c0_i32_0 = arith.constant 0 : i32
    %c0_i32_1 = arith.constant 0 : i32
    return %c0_i32, %arg0, %c0_i32_0 : i32, i32, i32
  }
  func.func @transform_1(%arg0: i32) -> (i32, i32) {
    %c0_i32 = arith.constant 0 : i32
    %c0_i32_0 = arith.constant 0 : i32
    %c0_i32_1 = arith.constant 0 : i32
    return %c0_i32, %c0_i32_0 : i32, i32
  }
  func.func @transform_2(%arg0: i32) -> (i32, i32) {
    %c0_i32 = arith.constant 0 : i32
    %c0_i32_0 = arith.constant 0 : i32
    %c0_i32_1 = arith.constant 0 : i32
    return %c0_i32, %c0_i32_0 : i32, i32
  }
  func.func @transform_3(%arg0: i32) -> (i32, i32, i32) {
    %c0_i32 = arith.constant 0 : i32
    %c0_i32_0 = arith.constant 0 : i32
    %c0_i32_1 = arith.constant 0 : i32
    return %c0_i32, %arg0, %c0_i32_0 : i32, i32, i32
  }
}

</mosaic_0001>

<llo_original>
// kernel: tpu_custom_call.1
$region0: #{tpu_custom_call.1}
  #allocation0 [shape = 'u32[]', space=smem, size = 0x4, offset = 0x4, fixed_abs, tag = 'smem constant byte address 0x4 - core index']
  #allocation1 [shape = 'u32[144,128]{1,0:T(1,128)}', space=vmem, size = 0x12000, scoped, tag = 'internal scratch']
  %s0 = inlined_call_operand.hbm [shape: f32[4,16,32], index: 0, kind: input, shape index: {}]
  %s1 = inlined_call_operand.hbm [shape: f32[32,128], index: 1, kind: input, shape index: {}]
  %s2 = inlined_call_operand.vmem [shape: f32[1,128], index: 2, kind: input, shape index: {}]
  %s3 = inlined_call_operand.hbm [shape: f32[4,16,128], index: 3, kind: output, shape index: {}]
  %s4 = sld [smem:[#allocation0]]
  $region53: #{tpu_custom_call.1} parent=0
    _
  %s6 = ssub.s32 1, %s4
  %s7 = scalar_select 0, %s6, %s4
  $region1: #{tpu_custom_call.1} parent=0
    #allocation2 [shape = 'u8[32768]{0}', space=vmem, size = 0x8000, scoped, tag = 'input window, operand 0']
    #allocation3 [shape = 's32[2]{0}', space=sflag, size = 0x8, scoped, tag = 'scoped memory for tpu_custom_call.1']
    #allocation4 [shape = 's32[2]{0}', space=sflag, size = 0x8, scoped, tag = 'scoped memory for tpu_custom_call.1']
    #allocation5 [shape = 'u8[16384]{0}', space=vmem, size = 0x4000, scoped, tag = 'input window, operand 1, single buffered']
    #allocation6 [shape = 's32[1]{0}', space=sflag, size = 0x4, scoped, tag = 'scoped memory for tpu_custom_call.1']
    #allocation7 [shape = 'u8[32768]{0}', space=vmem, size = 0x8000, scoped, tag = 'output window, operand 0']
    %8 = vsyncpa [#allocation3], 0
    %s9 = scalar_lea.sflag [#allocation3], 1
    %10 = vsyncpa %s9, 0
    %11 = vsyncpa [#allocation6], 0
    %12 = vsyncpa [#allocation4], 0
    %s13 = scalar_lea.sflag [#allocation4], 1
    %14 = vsyncpa %s13, 0
    loop: start=0, step=1, limit=4
    $region2: #{tpu_custom_call.1} parent=1 // loop_pre_header
      _
    $region3: #{tpu_custom_call.1} parent=1 // loop_header
      %s16 = sphi 0, %s20
      %p17 = scmp.ge.s32.totalorder %s16, 4
      %s26 = sphi 0, %s28
      %s29 = sphi 0, %s26
      %s30 = sphi 0, %s29
      %s46 = sphi 0, %s30
      %s50 = sphi 0, %s50
      %s52 = sphi 0, %s50
      %s53 = sphi 0, %s52
      %s67 = sphi 0, %s53
      %s71 = sphi 0, %s71
      %s73 = sphi 0, %s71
      %s74 = sphi 0, %s73
      %s88 = sphi 0, %s74
      %s94 = sphi 0, %s96
      %s97 = sphi 0, %s94
      %s98 = sphi 0, %s97
      %s114 = sphi 0, %s98
    $region4: #{tpu_custom_call.1} parent=1 // loop_header_branch
      %19 = sbr.rel (%p17) target = $region8
    $region5: #{tpu_custom_call.1} parent=1 // loop_body
      %s21 = ssub.s32 %s16, 1
      %s22 = ssub.s32 %s16, 2
      %s23 = sadd.s32 %s16, 1
      %s24 = ssub.s32 %s16, %s23
      %p25 = scmp.eq.s32.totalorder %s24, 0
      %s27 = sadd.s32 %s26, 1
      %s28 = scalar_select %p25, %s26, %s27
      %p31 = pneg %p25
      %p32 = scmp.eq.s32.totalorder %s16, 1
      %p33 = por %p31, %p32
      %p34 = scmp.ne.s32.totalorder %s26, %s29
      %p35 = scmp.eq.s32.totalorder %s16, 0
      %p36 = por %p34, %p35
      %p37 = scmp.ne.s32.totalorder %s26, %s29
      %p38 = scmp.eq.s32.totalorder %s21, 1
      %p39 = por %p37, %p38
      %p40 = scmp.ne.s32.totalorder %s29, %s30
      %p41 = scmp.eq.s32.totalorder %s21, 0
      %p42 = por %p40, %p41
      %p43 = scmp.ne.s32.totalorder %s29, %s30
      %p44 = scmp.eq.s32.totalorder %s22, 1
      %p45 = por %p43, %p44
      %p47 = scmp.ne.s32.totalorder %s30, %s46
      %p48 = scmp.eq.s32.totalorder %s22, 0
      %p49 = por %p47, %p48
      %s51 = sadd.s32 %s50, 1
      %p54 = scmp.eq.s32.totalorder %s16, 1
      %p55 = scmp.ne.s32.totalorder %s50, %s52
      %p56 = scmp.eq.s32.totalorder %s16, 0
      %p57 = por %p55, %p56
      %p58 = scmp.ne.s32.totalorder %s50, %s52
      %p59 = scmp.eq.s32.totalorder %s21, 1
      %p60 = por %p58, %p59
      %p61 = scmp.ne.s32.totalorder %s52, %s53
      %p62 = scmp.eq.s32.totalorder %s21, 0
      %p63 = por %p61, %p62
      %p64 = scmp.ne.s32.totalorder %s52, %s53
      %p65 = scmp.eq.s32.totalorder %s22, 1
      %p66 = por %p64, %p65
      %p68 = scmp.ne.s32.totalorder %s53, %s67
      %p69 = scmp.eq.s32.totalorder %s22, 0
      %p70 = por %p68, %p69
      %s72 = sadd.s32 %s71, 1
      %p75 = scmp.eq.s32.totalorder %s16, 1
      %p76 = scmp.ne.s32.totalorder %s71, %s73
      %p77 = scmp.eq.s32.totalorder %s16, 0
      %p78 = por %p76, %p77
      %p79 = scmp.ne.s32.totalorder %s71, %s73
      %p80 = scmp.eq.s32.totalorder %s21, 1
      %p81 = por %p79, %p80
      %p82 = scmp.ne.s32.totalorder %s73, %s74
      %p83 = scmp.eq.s32.totalorder %s21, 0
      %p84 = por %p82, %p83
      %p85 = scmp.ne.s32.totalorder %s73, %s74
      %p86 = scmp.eq.s32.totalorder %s22, 1
      %p87 = por %p85, %p86
      %p89 = scmp.ne.s32.totalorder %s74, %s88
      %p90 = scmp.eq.s32.totalorder %s22, 0
      %p91 = por %p89, %p90
      %s92 = ssub.s32 %s16, %s23
      %p93 = scmp.eq.s32.totalorder %s92, 0
      %s95 = sadd.s32 %s94, 1
      %s96 = scalar_select %p93, %s94, %s95
      %p99 = pneg %p93
      %p100 = scmp.eq.s32.totalorder %s16, 1
      %p101 = por %p99, %p100
      %p102 = scmp.ne.s32.totalorder %s94, %s97
      %p103 = scmp.eq.s32.totalorder %s16, 0
      %p104 = por %p102, %p103
      %p105 = scmp.ne.s32.totalorder %s94, %s97
      %p106 = scmp.eq.s32.totalorder %s21, 1
      %p107 = por %p105, %p106
      %p108 = scmp.ne.s32.totalorder %s97, %s98
      %p109 = scmp.eq.s32.totalorder %s21, 0
      %p110 = por %p108, %p109
      %p111 = scmp.ne.s32.totalorder %s97, %s98
      %p112 = scmp.eq.s32.totalorder %s22, 1
      %p113 = por %p111, %p112
      %p115 = scmp.ne.s32.totalorder %s98, %s114
      %p116 = scmp.eq.s32.totalorder %s22, 0
      %p117 = por %p115, %p116
      %p118 = scmp.le.s32.totalorder 1, %s16
      %p119 = scmp.lt.s32.totalorder %s16, 3
      %p120 = pnand %p118, %p119
      %p121 = pneg %p120
      // Predicated region
      $region9: #{tpu_custom_call.1} parent=5 // pred_check
        _
      $region10: #{tpu_custom_call.1} parent=5 // pred_check_branch
        %123 = sbr.rel (%p120) target = $region12
      $region11: #{tpu_custom_call.1} parent=5 // pred_region
        %s124 = ssub.s32 %s16, 1
        // Predicated region
        $region13: #{tpu_custom_call.1} parent=11 // pred_check
          %p125 = pneg %p63
        $region14: #{tpu_custom_call.1} parent=11 // pred_check_branch
          %127 = sbr.rel (%p125) target = $region16
        $region15: #{tpu_custom_call.1} parent=11 // pred_region
          %s129 = ssub.s32 512, 512
          %130 = vsyncadd [#allocation6], %s129
          %s131 = sshll.u32 [#allocation5], 4
          %s132 = int_to_ptr.vmem [resolvable:$true] %s131
          %137 = dma.hbm_to_vmem [thread:$0]  %s1, 512, %s132, [#allocation6], 128, 128, 8
        $region16: #{tpu_custom_call.1} parent=11 // pred_fallthru
          _
        // Predicated region
        $region17: #{tpu_custom_call.1} parent=11 // pred_check
          %p138 = pneg %p84
        $region18: #{tpu_custom_call.1} parent=11 // pred_check_branch
          %140 = sbr.rel (%p138) target = $region20
        $region19: #{tpu_custom_call.1} parent=11 // pred_region
          _
        $region20: #{tpu_custom_call.1} parent=11 // pred_fallthru
          _
      $region12: #{tpu_custom_call.1} parent=5 // pred_fallthru
        _
      %p141 = scmp.lt.s32.totalorder %s16, 2
      // Predicated region
      $region21: #{tpu_custom_call.1} parent=5 // pred_check
        %p142 = pneg %p141
      $region22: #{tpu_custom_call.1} parent=5 // pred_check_branch
        %144 = sbr.rel (%p142) target = $region24
      $region23: #{tpu_custom_call.1} parent=5 // pred_region
        // Predicated region
        $region25: #{tpu_custom_call.1} parent=23 // pred_check
          %p145 = pneg %p36
        $region26: #{tpu_custom_call.1} parent=23 // pred_check_branch
          %147 = sbr.rel (%p145) target = $region28
        $region27: #{tpu_custom_call.1} parent=23 // pred_region
          %s148 = sand.u32 %s26, 1
          %s149 = scalar_lea.sflag [#allocation3], %s148
          %s150 = sand.u32 %s26, 1
          %s151 = smul.addr %s150, 32
          %s152 = scalar_lea.vmem [#allocation2], %s151
          %s154 = ssub.s32 512, 512
          %155 = vsyncadd %s149, %s154
          %s156 = smul.addr %s16, 128
          %s157 = scalar_lea.hbm %s0, %s156
          %s158 = sshll.u32 %s152, 4
          %s159 = int_to_ptr.vmem [resolvable:$true] %s158
          %164 = dma.hbm_to_vmem [thread:$0]  %s157, 512, %s159, %s149, 256, 128, 8
        $region28: #{tpu_custom_call.1} parent=23 // pred_fallthru
          _
      $region24: #{tpu_custom_call.1} parent=5 // pred_fallthru
        _
      %p165 = scmp.le.s32.totalorder 1, %s16
      %p166 = scmp.lt.s32.totalorder %s16, 3
      %p167 = pnand %p165, %p166
      %p168 = pneg %p167
      // Predicated region
      $region29: #{tpu_custom_call.1} parent=5 // pred_check
        _
      $region30: #{tpu_custom_call.1} parent=5 // pred_check_branch
        %170 = sbr.rel (%p167) target = $region32
      $region31: #{tpu_custom_call.1} parent=5 // pred_region
        %s171 = ssub.s32 %s16, 1
        %s172 = sand.u32 %s29, 1
        %s173 = scalar_lea.sflag [#allocation3], %s172
        %s174 = sand.u32 %s29, 1
        %s175 = smul.addr %s174, 32
        %s176 = scalar_lea.vmem [#allocation2], %s175
        // Predicated region
        $region33: #{tpu_custom_call.1} parent=31 // pred_check
          %p177 = pneg %p42
        $region34: #{tpu_custom_call.1} parent=31 // pred_check_branch
          %179 = sbr.rel (%p177) target = $region36
        $region35: #{tpu_custom_call.1} parent=31 // pred_region
          %180 = dma.done %s173, 512
        $region36: #{tpu_custom_call.1} parent=31 // pred_fallthru
          _
        // Predicated region
        $region37: #{tpu_custom_call.1} parent=31 // pred_check
          %p181 = pneg %p63
        $region38: #{tpu_custom_call.1} parent=31 // pred_check_branch
          %183 = sbr.rel (%p181) target = $region40
        $region39: #{tpu_custom_call.1} parent=31 // pred_region
          %184 = dma.done [#allocation6], 512
        $region40: #{tpu_custom_call.1} parent=31 // pred_fallthru
          _
        %s185 = sand.u32 %s29, 1
        %s186 = scalar_lea.sflag [#allocation3], %s185
        %s187 = sand.u32 %s29, 1
        %s188 = smul.addr %s187, 32
        %s189 = scalar_lea.vmem [#allocation2], %s188
        %p190 = pneg %p42
        %p191 = pneg %p39
        %p192 = pneg %p63
        %p193 = pneg %p60
        %p194 = pneg %p84
        %p195 = pneg %p81
        %p196 = pneg %p110
        %p197 = pneg %p107
        %s198 = sand.u32 %s97, 1
        %s199 = scalar_lea.sflag [#allocation4], %s198
        %s200 = sand.u32 %s97, 1
        %s201 = smul.addr %s200, 32
        %s202 = scalar_lea.vmem [#allocation7], %s201
        %v203 = vld [vmem:[#allocation5] sm:$0xff]
        %v204 = vld [vmem:[#allocation5 + $0x8] sm:$0xff]
        %v205 = vld [vmem:[#allocation5 + $0x10] sm:$0xff]
        %v206 = vld [vmem:[#allocation5 + $0x18] sm:$0xff]
        %v207 = vld [vmem:[%s2] sm:$0x1]
        %v208 = vld [vmem:[%s176] sm:$0xff]
        %v210 = vlaneseq
        %v211 = vshrl.u32 %v210, 7
        %v212 = vsub.s32 0, %v211
        %v213 = vrot.slane %v207, %v212
        %vm215 = vcmask 261120
        %v217 = vsel %vm215, %v208, 0
        %219 = vmatprep.subr.mxu0 0.0
        %220 = vmatpush1.msra.mxu0 %v203
        %221 = vmatprep.subr.mxu0 0.0
        %222 = vmatpush1.msra.mxu0 %v204
        %223 = vmatprep.subr.mxu0 0.0
        %224 = vmatpush1.msra.mxu0 %v205
        %225 = vmatprep.subr.mxu0 0.0
        %226 = vmatpush1.msra.mxu0 %v206
        %227 = vmatprep.subr.mxu0 0.0
        %228 = vmatpush1.msra.mxu0 0.0
        %229 = vmatprep.subr.mxu0 0.0
        %230 = vmatpush1.msra.mxu0 0.0
        %231 = vmatprep.subr.mxu0 0.0
        %232 = vmatpush1.msra.mxu0 0.0
        %233 = vmatprep.subr.mxu0 0.0
        %234 = vmatpush1.msra.mxu0 0.0
        %235 = vmatprep.subr.mxu0 0.0
        %236 = vmatpush1.msra.mxu0 0.0
        %237 = vmatprep.subr.mxu0 0.0
        %238 = vmatpush1.msra.mxu0 0.0
        %239 = vmatprep.subr.mxu0 0.0
        %240 = vmatpush1.msra.mxu0 0.0
        %241 = vmatprep.subr.mxu0 0.0
        %242 = vmatpush1.msra.mxu0 0.0
        %243 = vmatprep.subr.mxu0 0.0
        %244 = vmatpush1.msra.mxu0 0.0
        %245 = vmatprep.subr.mxu0 0.0
        %246 = vmatpush1.msra.mxu0 0.0
        %247 = vmatprep.subr.mxu0 0.0
        %248 = vmatpush1.msra.mxu0 0.0
        %249 = vmatprep.subr.mxu0 0.0
        %250 = vmatpush1.msra.mxu0 0.0
        %251 = vmatprep.subr.mxu0 0.0
        %252 = vmatpush1.msra.mxu0 0.0
        %253 = vmatprep.subr.mxu0 0.0
        %254 = vmatpush1.msra.mxu0 0.0
        %255 = vmatprep.subr.mxu0 0.0
        %256 = vmatpush1.msra.mxu0 0.0
        %257 = vmatprep.subr.mxu0 0.0
        %258 = vmatpush1.msra.mxu0 0.0
        %259 = vmatprep.subr.mxu0 0.0
        %260 = vmatpush1.msra.mxu0 0.0
        %261 = vmatprep.subr.mxu0 0.0
        %262 = vmatpush1.msra.mxu0 0.0
        %263 = vmatprep.subr.mxu0 0.0
        %264 = vmatpush1.msra.mxu0 0.0
        %265 = vmatprep.subr.mxu0 0.0
        %266 = vmatpush1.msra.mxu0 0.0
        %267 = vmatprep.subr.mxu0 0.0
        %268 = vmatpush1.msra.mxu0 0.0
        %269 = vmatprep.subr.mxu0 0.0
        %270 = vmatpush1.msra.mxu0 0.0
        %271 = vmatprep.subr.mxu0 0.0
        %272 = vmatpush1.msra.mxu0 0.0
        %273 = vmatprep.subr.mxu0 0.0
        %274 = vmatpush1.msra.mxu0 0.0
        %275 = vmatprep.subr.mxu0 0.0
        %276 = vmatpush1.msra.mxu0 0.0
        %277 = vmatprep.subr.mxu0 0.0
        %278 = vmatpush1.msra.mxu0 0.0
        %279 = vmatprep.subr.mxu0 0.0
        %280 = vmatpush1.msra.mxu0 0.0
        %281 = vmatprep.subr.mxu0 0.0
        %282 = vmatpush1.msra.mxu0 0.0
        %283 = vmatprep.mubr.f32.mxu0 0.0
        %284 = vmatmul.mubr.f32.gmra.mrb[0].mxu0 %v217
        %v285 = vpop.f32.mrb[0].mxu0
        %v286 = vadd.f32 %v213, %v285
        %v287 = vpop.f32.mrb[0].mxu0
        %288 = vdwg.mxu0
        %289 = vst [vmem:[%s202] sm:$0xff] %v286
        %s290 = scalar_lea.vmem %s176, 8 [#allocation2]
        %v291 = vld [vmem:[%s290] sm:$0xff]
        %v293 = vsel %vm215, %v291, 0
        %295 = vmatprep.subr.mxu0 0.0
        %296 = vmatpush1.msra.mxu0 %v203
        %297 = vmatprep.subr.mxu0 0.0
        %298 = vmatpush1.msra.mxu0 %v204
        %299 = vmatprep.subr.mxu0 0.0
        %300 = vmatpush1.msra.mxu0 %v205
        %301 = vmatprep.subr.mxu0 0.0
        %302 = vmatpush1.msra.mxu0 %v206
        %303 = vmatprep.subr.mxu0 0.0
        %304 = vmatpush1.msra.mxu0 0.0
        %305 = vmatprep.subr.mxu0 0.0
        %306 = vmatpush1.msra.mxu0 0.0
        %307 = vmatprep.subr.mxu0 0.0
        %308 = vmatpush1.msra.mxu0 0.0
        %309 = vmatprep.subr.mxu0 0.0
        %310 = vmatpush1.msra.mxu0 0.0
        %311 = vmatprep.subr.mxu0 0.0
        %312 = vmatpush1.msra.mxu0 0.0
        %313 = vmatprep.subr.mxu0 0.0
        %314 = vmatpush1.msra.mxu0 0.0
        %315 = vmatprep.subr.mxu0 0.0
        %316 = vmatpush1.msra.mxu0 0.0
        %317 = vmatprep.subr.mxu0 0.0
        %318 = vmatpush1.msra.mxu0 0.0
        %319 = vmatprep.subr.mxu0 0.0
        %320 = vmatpush1.msra.mxu0 0.0
        %321 = vmatprep.subr.mxu0 0.0
        %322 = vmatpush1.msra.mxu0 0.0
        %323 = vmatprep.subr.mxu0 0.0
        %324 = vmatpush1.msra.mxu0 0.0
        %325 = vmatprep.subr.mxu0 0.0
        %326 = vmatpush1.msra.mxu0 0.0
        %327 = vmatprep.subr.mxu0 0.0
        %328 = vmatpush1.msra.mxu0 0.0
        %329 = vmatprep.subr.mxu0 0.0
        %330 = vmatpush1.msra.mxu0 0.0
        %331 = vmatprep.subr.mxu0 0.0
        %332 = vmatpush1.msra.mxu0 0.0
        %333 = vmatprep.subr.mxu0 0.0
        %334 = vmatpush1.msra.mxu0 0.0
        %335 = vmatprep.subr.mxu0 0.0
        %336 = vmatpush1.msra.mxu0 0.0
        %337 = vmatprep.subr.mxu0 0.0
        %338 = vmatpush1.msra.mxu0 0.0
        %339 = vmatprep.subr.mxu0 0.0
        %340 = vmatpush1.msra.mxu0 0.0
        %341 = vmatprep.subr.mxu0 0.0
        %342 = vmatpush1.msra.mxu0 0.0
        %343 = vmatprep.subr.mxu0 0.0
        %344 = vmatpush1.msra.mxu0 0.0
        %345 = vmatprep.subr.mxu0 0.0
        %346 = vmatpush1.msra.mxu0 0.0
        %347 = vmatprep.subr.mxu0 0.0
        %348 = vmatpush1.msra.mxu0 0.0
        %349 = vmatprep.subr.mxu0 0.0
        %350 = vmatpush1.msra.mxu0 0.0
        %351 = vmatprep.subr.mxu0 0.0
        %352 = vmatpush1.msra.mxu0 0.0
        %353 = vmatprep.subr.mxu0 0.0
        %354 = vmatpush1.msra.mxu0 0.0
        %355 = vmatprep.subr.mxu0 0.0
        %356 = vmatpush1.msra.mxu0 0.0
        %357 = vmatprep.subr.mxu0 0.0
        %358 = vmatpush1.msra.mxu0 0.0
        %359 = vmatprep.mubr.f32.mxu0 0.0
        %360 = vmatmul.mubr.f32.gmra.mrb[0].mxu0 %v293
        %v361 = vpop.f32.mrb[0].mxu0
        %v362 = vadd.f32 %v213, %v361
        %v363 = vpop.f32.mrb[0].mxu0
        %364 = vdwg.mxu0
        %v365 = vmul.f32 %v362, 0.5
        %v366 = vtanh.pop %v365
        %v367 = vmul.f32 %v366, 0.5
        %v368 = vadd.f32 %v367, 0.5
        %v369 = vmul.f32 %v286, %v368
        %s370 = scalar_lea.vmem %s202, 8 [#allocation7]
        %371 = vst [vmem:[%s370] sm:$0xff] %v369
        %s372 = scalar_lea.vmem %s176, 16 [#allocation2]
        %v373 = vld [vmem:[%s372] sm:$0xff]
        %v375 = vsel %vm215, %v373, 0
        %377 = vmatprep.subr.mxu0 0.0
        %378 = vmatpush1.msra.mxu0 %v203
        %379 = vmatprep.subr.mxu0 0.0
        %380 = vmatpush1.msra.mxu0 %v204
        %381 = vmatprep.subr.mxu0 0.0
        %382 = vmatpush1.msra.mxu0 %v205
        %383 = vmatprep.subr.mxu0 0.0
        %384 = vmatpush1.msra.mxu0 %v206
        %385 = vmatprep.subr.mxu0 0.0
        %386 = vmatpush1.msra.mxu0 0.0
        %387 = vmatprep.subr.mxu0 0.0
        %388 = vmatpush1.msra.mxu0 0.0
        %389 = vmatprep.subr.mxu0 0.0
        %390 = vmatpush1.msra.mxu0 0.0
        %391 = vmatprep.subr.mxu0 0.0
        %392 = vmatpush1.msra.mxu0 0.0
        %393 = vmatprep.subr.mxu0 0.0
        %394 = vmatpush1.msra.mxu0 0.0
        %395 = vmatprep.subr.mxu0 0.0
        %396 = vmatpush1.msra.mxu0 0.0
        %397 = vmatprep.subr.mxu0 0.0
        %398 = vmatpush1.msra.mxu0 0.0
        %399 = vmatprep.subr.mxu0 0.0
        %400 = vmatpush1.msra.mxu0 0.0
        %401 = vmatprep.subr.mxu0 0.0
        %402 = vmatpush1.msra.mxu0 0.0
        %403 = vmatprep.subr.mxu0 0.0
        %404 = vmatpush1.msra.mxu0 0.0
        %405 = vmatprep.subr.mxu0 0.0
        %406 = vmatpush1.msra.mxu0 0.0
        %407 = vmatprep.subr.mxu0 0.0
        %408 = vmatpush1.msra.mxu0 0.0
        %409 = vmatprep.subr.mxu0 0.0
        %410 = vmatpush1.msra.mxu0 0.0
        %411 = vmatprep.subr.mxu0 0.0
        %412 = vmatpush1.msra.mxu0 0.0
        %413 = vmatprep.subr.mxu0 0.0
        %414 = vmatpush1.msra.mxu0 0.0
        %415 = vmatprep.subr.mxu0 0.0
        %416 = vmatpush1.msra.mxu0 0.0
        %417 = vmatprep.subr.mxu0 0.0
        %418 = vmatpush1.msra.mxu0 0.0
        %419 = vmatprep.subr.mxu0 0.0
        %420 = vmatpush1.msra.mxu0 0.0
        %421 = vmatprep.subr.mxu0 0.0
        %422 = vmatpush1.msra.mxu0 0.0
        %423 = vmatprep.subr.mxu0 0.0
        %424 = vmatpush1.msra.mxu0 0.0
        %425 = vmatprep.subr.mxu0 0.0
        %426 = vmatpush1.msra.mxu0 0.0
        %427 = vmatprep.subr.mxu0 0.0
        %428 = vmatpush1.msra.mxu0 0.0
        %429 = vmatprep.subr.mxu0 0.0
        %430 = vmatpush1.msra.mxu0 0.0
        %431 = vmatprep.subr.mxu0 0.0
        %432 = vmatpush1.msra.mxu0 0.0
        %433 = vmatprep.subr.mxu0 0.0
        %434 = vmatpush1.msra.mxu0 0.0
        %435 = vmatprep.subr.mxu0 0.0
        %436 = vmatpush1.msra.mxu0 0.0
        %437 = vmatprep.subr.mxu0 0.0
        %438 = vmatpush1.msra.mxu0 0.0
        %439 = vmatprep.subr.mxu0 0.0
        %440 = vmatpush1.msra.mxu0 0.0
        %441 = vmatprep.mubr.f32.mxu0 0.0
        %442 = vmatmul.mubr.f32.gmra.mrb[0].mxu0 %v375
        %v443 = vpop.f32.mrb[0].mxu0
        %v444 = vadd.f32 %v213, %v443
        %v445 = vpop.f32.mrb[0].mxu0
        %446 = vdwg.mxu0
        %v447 = vmul.f32 %v444, 0.5
        %v448 = vtanh.pop %v447
        %v449 = vmul.f32 %v448, 0.5
        %v450 = vadd.f32 %v449, 0.5
        %v451 = vmul.f32 %v369, %v450
        %s452 = scalar_lea.vmem %s202, 16 [#allocation7]
        %453 = vst [vmem:[%s452] sm:$0xff] %v451
        %s454 = scalar_lea.vmem %s176, 24 [#allocation2]
        %v455 = vld [vmem:[%s454] sm:$0xff]
        %v457 = vsel %vm215, %v455, 0
        %459 = vmatprep.subr.mxu0 0.0
        %460 = vmatpush1.msra.mxu0 %v203
        %461 = vmatprep.subr.mxu0 0.0
        %462 = vmatpush1.msra.mxu0 %v204
        %463 = vmatprep.subr.mxu0 0.0
        %464 = vmatpush1.msra.mxu0 %v205
        %465 = vmatprep.subr.mxu0 0.0
        %466 = vmatpush1.msra.mxu0 %v206
        %467 = vmatprep.subr.mxu0 0.0
        %468 = vmatpush1.msra.mxu0 0.0
        %469 = vmatprep.subr.mxu0 0.0
        %470 = vmatpush1.msra.mxu0 0.0
        %471 = vmatprep.subr.mxu0 0.0
        %472 = vmatpush1.msra.mxu0 0.0
        %473 = vmatprep.subr.mxu0 0.0
        %474 = vmatpush1.msra.mxu0 0.0
        %475 = vmatprep.subr.mxu0 0.0
        %476 = vmatpush1.msra.mxu0 0.0
        %477 = vmatprep.subr.mxu0 0.0
        %478 = vmatpush1.msra.mxu0 0.0
        %479 = vmatprep.subr.mxu0 0.0
        %480 = vmatpush1.msra.mxu0 0.0
        %481 = vmatprep.subr.mxu0 0.0
        %482 = vmatpush1.msra.mxu0 0.0
        %483 = vmatprep.subr.mxu0 0.0
        %484 = vmatpush1.msra.mxu0 0.0
        %485 = vmatprep.subr.mxu0 0.0
        %486 = vmatpush1.msra.mxu0 0.0
        %487 = vmatprep.subr.mxu0 0.0
        %488 = vmatpush1.msra.mxu0 0.0
        %489 = vmatprep.subr.mxu0 0.0
        %490 = vmatpush1.msra.mxu0 0.0
        %491 = vmatprep.subr.mxu0 0.0
        %492 = vmatpush1.msra.mxu0 0.0
        %493 = vmatprep.subr.mxu0 0.0
        %494 = vmatpush1.msra.mxu0 0.0
        %495 = vmatprep.subr.mxu0 0.0
        %496 = vmatpush1.msra.mxu0 0.0
        %497 = vmatprep.subr.mxu0 0.0
        %498 = vmatpush1.msra.mxu0 0.0
        %499 = vmatprep.subr.mxu0 0.0
        %500 = vmatpush1.msra.mxu0 0.0
        %501 = vmatprep.subr.mxu0 0.0
        %502 = vmatpush1.msra.mxu0 0.0
        %503 = vmatprep.subr.mxu0 0.0
        %504 = vmatpush1.msra.mxu0 0.0
        %505 = vmatprep.subr.mxu0 0.0
        %506 = vmatpush1.msra.mxu0 0.0
        %507 = vmatprep.subr.mxu0 0.0
        %508 = vmatpush1.msra.mxu0 0.0
        %509 = vmatprep.subr.mxu0 0.0
        %510 = vmatpush1.msra.mxu0 0.0
        %511 = vmatprep.subr.mxu0 0.0
        %512 = vmatpush1.msra.mxu0 0.0
        %513 = vmatprep.subr.mxu0 0.0
        %514 = vmatpush1.msra.mxu0 0.0
        %515 = vmatprep.subr.mxu0 0.0
        %516 = vmatpush1.msra.mxu0 0.0
        %517 = vmatprep.subr.mxu0 0.0
        %518 = vmatpush1.msra.mxu0 0.0
        %519 = vmatprep.subr.mxu0 0.0
        %520 = vmatpush1.msra.mxu0 0.0
        %521 = vmatprep.subr.mxu0 0.0
        %522 = vmatpush1.msra.mxu0 0.0
        %523 = vmatprep.mubr.f32.mxu0 0.0
        %524 = vmatmul.mubr.f32.gmra.mrb[0].mxu0 %v457
        %v525 = vpop.f32.mrb[0].mxu0
        %v526 = vadd.f32 %v213, %v525
        %v527 = vpop.f32.mrb[0].mxu0
        %528 = vdwg.mxu0
        %v529 = vmul.f32 %v526, 0.5
        %v530 = vtanh.pop %v529
        %v531 = vmul.f32 %v530, 0.5
        %v532 = vadd.f32 %v531, 0.5
        %v533 = vmul.f32 %v451, %v532
        %s534 = scalar_lea.vmem %s202, 24 [#allocation7]
        %535 = vst [vmem:[%s534] sm:$0xff] %v533
        %s536 = sand.u32 %s97, 1
        %s537 = scalar_lea.sflag [#allocation4], %s536
        %s538 = sand.u32 %s97, 1
        %s539 = smul.addr %s538, 32
        %s540 = scalar_lea.vmem [#allocation7], %s539
        // Predicated region
        $region41: #{tpu_custom_call.1} parent=31 // pred_check
          %p541 = pneg %p107
        $region42: #{tpu_custom_call.1} parent=31 // pred_check_branch
          %543 = sbr.rel (%p541) target = $region44
        $region43: #{tpu_custom_call.1} parent=31 // pred_region
          %s545 = ssub.s32 512, 512
          %546 = vsyncadd %s537, %s545
          %s547 = smul.addr %s21, 128
          %s548 = scalar_lea.hbm %s3, %s547
          %s549 = sshll.u32 %s540, 4
          %s550 = int_to_ptr.vmem [resolvable:$true] %s549
          %555 = dma.vmem_to_hbm [thread:$0]  %s550, 512, %s548, %s537, 128, 256, 8
        $region44: #{tpu_custom_call.1} parent=31 // pred_fallthru
          _
      $region32: #{tpu_custom_call.1} parent=5 // pred_fallthru
        _
      %p556 = scmp.le.s32.totalorder 2, %s16
      // Predicated region
      $region45: #{tpu_custom_call.1} parent=5 // pred_check
        %p557 = pneg %p556
      $region46: #{tpu_custom_call.1} parent=5 // pred_check_branch
        %559 = sbr.rel (%p557) target = $region48
      $region47: #{tpu_custom_call.1} parent=5 // pred_region
        %s560 = ssub.s32 %s16, 2
        // Predicated region
        $region49: #{tpu_custom_call.1} parent=47 // pred_check
          %p561 = pneg %p113
        $region50: #{tpu_custom_call.1} parent=47 // pred_check_branch
          %563 = sbr.rel (%p561) target = $region52
        $region51: #{tpu_custom_call.1} parent=47 // pred_region
          %s564 = sand.u32 %s98, 1
          %s565 = scalar_lea.sflag [#allocation4], %s564
          %s566 = sand.u32 %s98, 1
          %s567 = smul.addr %s566, 32
          %s568 = scalar_lea.vmem [#allocation7], %s567
          %569 = dma.done %s565, 512
        $region52: #{tpu_custom_call.1} parent=47 // pred_fallthru
          _
      $region48: #{tpu_custom_call.1} parent=5 // pred_fallthru
        _
    $region6: #{tpu_custom_call.1} parent=1 // loop_footer
      %s20 = sadd.s32 1, %s16
    $region7: #{tpu_custom_call.1} parent=1 // loop_footer_branch
      %15 = sbr.rel target = $region3
    $region8: #{tpu_custom_call.1} parent=1 // loop_exit
      _
    %570 = vsyncpa [#allocation3], 1
    %s571 = scalar_lea.sflag [#allocation3], 1
    %572 = vsyncpa %s571, 1
    %573 = vsyncpa [#allocation6], 1
    %574 = vsyncpa [#allocation4], 1
    %s575 = scalar_lea.sflag [#allocation4], 1
    %576 = vsyncpa %s575, 1

</llo_original>
